<compile_context>
chip_gen: v5e
topology: v5e:2x2
jax: 0.10.0
libtpu: 0.0.40
codegen_flags: <defaults>
</compile_context>

<pallas_src>
import functools

import jax
import jax.numpy as jnp
from jax.experimental import pallas as pl
from jax.experimental.pallas import tpu as pltpu

LANE = 128


def policy_kernel(x_ref, w1_ref, b1_ref, w2_ref, b2_ref, o_ref):
    # Layer 1: Linear + ReLU (weights/biases are VMEM-resident, x streams).
    x = x_ref[...]
    h = jnp.dot(x, w1_ref[...], preferred_element_type=jnp.float32) + b1_ref[...]
    h = jnp.maximum(h, 0.0)

    # Layer 2: Linear into lane-padded logits.  Pad lanes carry a -1e30 bias,
    # so after exp() they contribute exactly 0 to the softmax denominator.
    logits = jnp.dot(h, w2_ref[...], preferred_element_type=jnp.float32) + b2_ref[...]

    # Numerically-stable softmax over the last (lane) axis.
    m = jnp.max(logits, axis=-1, keepdims=True)
    e = jnp.exp(logits - m)
    denom = jnp.sum(e, axis=-1, keepdims=True)
    inv = pl.reciprocal(denom, approx=False)       # exact, keeps 1e-5 tolerance
    probs = e * inv

    # Narrow store: only the real action columns leave VMEM (masked vst, but
    # 64x fewer HBM bytes than a lane-dense 128-wide store for A=2).
    A = o_ref.shape[-1]
    o_ref[...] = probs[:, :A].astype(o_ref.dtype)


def prepare_policy_params(W1, b1, W2, b2):
    """Preprocess parameters ONCE per parameter update.

    W1: (H, In), b1: (H,), W2: (A, H), b2: (A,)  -- PyTorch nn.Linear layout.
    Returns (w1_t, b1_r, w2_t, b2_r) ready for policy_forward().
    """
    H, In = W1.shape
    A = W2.shape[0]
    A_pad = pl.cdiv(A, LANE) * LANE

    w1_t = jnp.asarray(W1, jnp.float32).T                       # (In, H)
    b1_r = jnp.asarray(b1, jnp.float32).reshape(1, H)           # (1, H)
    # Lane-pad layer 2 for the internal matmul/softmax; pad-lane bias = -1e30.
    w2_t = jnp.zeros((H, A_pad), jnp.float32).at[:, :A].set(
        jnp.asarray(W2, jnp.float32).T)                          # (H, A_pad)
    b2_r = jnp.full((1, A_pad), -1e30, jnp.float32).at[0, :A].set(
        jnp.asarray(b2, jnp.float32))                            # (1, A_pad)
    return w1_t, b1_r, w2_t, b2_r


@functools.partial(jax.jit, static_argnames=("action_size", "block_b"))
def policy_forward(x, w1_t, b1_r, w2_t, b2_r, *, action_size, block_b=2048):
    """Forward pass of Policy.

    x: (B, In) float32, params from prepare_policy_params().
    Returns (B, action_size) probabilities (softmax over dim=1).
    """
    B, In = x.shape
    H = w1_t.shape[1]
    A_pad = w2_t.shape[1]
    A = action_size

    # Batch tiling: biggest sublane-aligned tile <= block_b ...
    TB = max(8, (min(block_b, B) // 8) * 8)
    # ... but capped so the grid has >= ~4 steps when the batch allows it, so
    # the "parallel" axis can be sharded across both v7x TensorCores.
    if B >= 32:
        tb_quarter = max(8, ((pl.cdiv(B, 4) + 7) // 8) * 8)
        TB = min(TB, tb_quarter)

    B_pad = pl.cdiv(B, TB) * TB
    x = x.astype(jnp.float32)
    if B_pad != B:
        x = jnp.pad(x, ((0, B_pad - B), (0, 0)))

    out = pl.pallas_call(
        policy_kernel,
        out_shape=jax.ShapeDtypeStruct((B_pad, A), jnp.float32),
        grid=(B_pad // TB,),
        in_specs=[
            pl.BlockSpec((TB, In), lambda i: (i, 0)),      # x tile: streams
            pl.BlockSpec((In, H), lambda i: (0, 0)),       # weights: resident
            pl.BlockSpec((1, H), lambda i: (0, 0)),
            pl.BlockSpec((H, A_pad), lambda i: (0, 0)),
            pl.BlockSpec((1, A_pad), lambda i: (0, 0)),
        ],
        out_specs=pl.BlockSpec((TB, A), lambda i: (i, 0)),  # narrow output
        compiler_params=pltpu.CompilerParams(
            dimension_semantics=("parallel",)),             # megacore on v7x
    )(x, w1_t, b1_r, w2_t, b2_r)

    return out[:B]


if __name__ == "__main__":
    # Small shapes consistent with a REINFORCE CartPole-style policy.
    batch = 37          # deliberately ragged: exercises batch padding + slice
    input_size = 4
    hidden_size = 32
    action_size = 2

    key = jax.random.PRNGKey(0)
    k_x, k_w1, k_b1, k_w2, k_b2 = jax.random.split(key, 5)

    x = jax.random.normal(k_x, (batch, input_size), dtype=jnp.float32)

    # PyTorch Linear stores W as (out, in); keep that convention here.
    W1 = jax.random.normal(k_w1, (hidden_size, input_size), dtype=jnp.float32) * 0.1
    b1 = jax.random.normal(k_b1, (hidden_size,), dtype=jnp.float32) * 0.1
    W2 = jax.random.normal(k_w2, (action_size, hidden_size), dtype=jnp.float32) * 0.1
    b2 = jax.random.normal(k_b2, (action_size,), dtype=jnp.float32) * 0.1

    # Prep is hoisted: once per parameter update, not once per forward.
    params = prepare_policy_params(W1, b1, W2, b2)

    # With batch=37 the TB cap yields a multi-step grid (exercises pipeline +
    # parallel axis) even at the large default block_b.
    out = policy_forward(x, *params, action_size=action_size)
    out = jax.block_until_ready(out)

    # Reference in plain JAX (same math as the PyTorch forward).
    h_ref = jnp.maximum(x @ W1.T + b1, 0.0)
    logits_ref = h_ref @ W2.T + b2
    ref = jax.nn.softmax(logits_ref, axis=1)

    assert out.shape == (batch, action_size)
    assert jnp.allclose(out, ref, atol=1e-5, rtol=1e-5)
    assert jnp.allclose(jnp.sum(out, axis=1), 1.0, atol=1e-5)

    print("KERNEL_OK")
</pallas_src>

<mosaic_0001>
module attributes {stable_mosaic.version = 11 : i64} {
  func.func @policy_kernel(%arg0: i32, %arg1: memref<16x4xf32, #tpu.memory_space<vmem>>, %arg2: memref<4x32xf32, #tpu.memory_space<vmem>>, %arg3: memref<1x32xf32, #tpu.memory_space<vmem>>, %arg4: memref<32x128xf32, #tpu.memory_space<vmem>>, %arg5: memref<1x128xf32, #tpu.memory_space<vmem>>, %arg6: memref<16x2xf32, #tpu.memory_space<vmem>>) attributes {dimension_semantics = [#tpu.dimension_semantics<parallel>], iteration_bounds = array<i64: 3>, scalar_prefetch = 0 : i64, scratch_operands = 0 : i64, tpu.core_type = #tpu.core_type<tc>, window_params = [{transform_indices = @transform_0, window_bounds = array<i64: 16, 4>}, {pipeline_mode = #tpu.pipeline_mode<synchronous>, transform_indices = @transform_1, window_bounds = array<i64: 4, 32>}, {pipeline_mode = #tpu.pipeline_mode<synchronous>, transform_indices = @transform_2, window_bounds = array<i64: 1, 32>}, {pipeline_mode = #tpu.pipeline_mode<synchronous>, transform_indices = @transform_3, window_bounds = array<i64: 32, 128>}, {pipeline_mode = #tpu.pipeline_mode<synchronous>, transform_indices = @transform_4, window_bounds = array<i64: 1, 128>}, {transform_indices = @transform_5, window_bounds = array<i64: 16, 2>}]} {
    %c0 = arith.constant 0 : index
    %c0_0 = arith.constant 0 : index
    %0 = vector.load %arg1[%c0, %c0_0] : memref<16x4xf32, #tpu.memory_space<vmem>>, vector<16x4xf32>
    %c0_1 = arith.constant 0 : index
    %c0_2 = arith.constant 0 : index
    %1 = vector.load %arg2[%c0_1, %c0_2] : memref<4x32xf32, #tpu.memory_space<vmem>>, vector<4x32xf32>
    %cst = arith.constant dense<0.000000e+00> : vector<16x32xf32>
    %2 = tpu.matmul %0, %1, %cst {dimension_numbers = #tpu.dot_dimension_numbers<[1], [0], [0], [1], [0, 0, 1, 1], [], []>} : vector<16x4xf32>, vector<4x32xf32>, vector<16x32xf32> -> vector<16x32xf32>
    %c0_3 = arith.constant 0 : index
    %c0_4 = arith.constant 0 : index
    %3 = vector.load %arg3[%c0_3, %c0_4] : memref<1x32xf32, #tpu.memory_space<vmem>>, vector<1x32xf32>
    %4 = vector.broadcast %3 : vector<1x32xf32> to vector<16x32xf32>
    %5 = arith.addf %2, %4 : vector<16x32xf32>
    %cst_5 = arith.constant 0.000000e+00 : f32
    %6 = vector.broadcast %cst_5 : f32 to vector<16x32xf32>
    %7 = arith.maximumf %5, %6 : vector<16x32xf32>
    %c0_6 = arith.constant 0 : index
    %c0_7 = arith.constant 0 : index
    %8 = vector.load %arg4[%c0_6, %c0_7] : memref<32x128xf32, #tpu.memory_space<vmem>>, vector<32x128xf32>
    %cst_8 = arith.constant dense<0.000000e+00> : vector<16x128xf32>
    %9 = tpu.matmul %7, %8, %cst_8 {dimension_numbers = #tpu.dot_dimension_numbers<[1], [0], [0], [1], [0, 0, 1, 1], [], []>} : vector<16x32xf32>, vector<32x128xf32>, vector<16x128xf32> -> vector<16x128xf32>
    %c0_9 = arith.constant 0 : index
    %c0_10 = arith.constant 0 : index
    %10 = vector.load %arg5[%c0_9, %c0_10] : memref<1x128xf32, #tpu.memory_space<vmem>>, vector<1x128xf32>
    %11 = vector.broadcast %10 : vector<1x128xf32> to vector<16x128xf32>
    %12 = arith.addf %9, %11 : vector<16x128xf32>
    %cst_11 = arith.constant dense<0xFF800000> : vector<16xf32>
    %13 = vector.multi_reduction <maximumf>, %12, %cst_11 [1] : vector<16x128xf32> to vector<16xf32>
    %14 = vector.shape_cast %13 : vector<16xf32> to vector<16x1xf32>
    %15 = vector.broadcast %14 : vector<16x1xf32> to vector<16x128xf32>
    %16 = arith.subf %12, %15 : vector<16x128xf32>
    %17 = math.exp %16 : vector<16x128xf32>
    %cst_12 = arith.constant dense<0.000000e+00> : vector<16xf32>
    %18 = vector.multi_reduction <add>, %17, %cst_12 [1] : vector<16x128xf32> to vector<16xf32>
    %19 = vector.shape_cast %18 : vector<16xf32> to vector<16x1xf32>
    %20 = tpu.reciprocal %19 : vector<16x1xf32> -> vector<16x1xf32>
    %21 = vector.broadcast %20 : vector<16x1xf32> to vector<16x128xf32>
    %22 = arith.mulf %17, %21 : vector<16x128xf32>
    %23 = vector.extract_strided_slice %22 {offsets = [0, 0], sizes = [16, 2], strides = [1, 1]} : vector<16x128xf32> to vector<16x2xf32>
    %c0_13 = arith.constant 0 : index
    %c0_14 = arith.constant 0 : index
    %24 = vector.load %arg6[%c0_13, %c0_14] : memref<16x2xf32, #tpu.memory_space<vmem>>, vector<16x2xf32>
    tpu.vector_store %arg6[%c0_13, %c0_14], %23 {strides = array<i32>} : memref<16x2xf32, #tpu.memory_space<vmem>>, vector<16x2xf32>,
    return
  }
  func.func @transform_0(%arg0: i32) -> (i32, i32) {
    %c0_i32 = arith.constant 0 : i32
    %c0_i32_0 = arith.constant 0 : i32
    return %arg0, %c0_i32 : i32, i32
  }
  func.func @transform_1(%arg0: i32) -> (i32, i32) {
    %c0_i32 = arith.constant 0 : i32
    %c0_i32_0 = arith.constant 0 : i32
    %c0_i32_1 = arith.constant 0 : i32
    return %c0_i32, %c0_i32_0 : i32, i32
  }
  func.func @transform_2(%arg0: i32) -> (i32, i32) {
    %c0_i32 = arith.constant 0 : i32
    %c0_i32_0 = arith.constant 0 : i32
    %c0_i32_1 = arith.constant 0 : i32
    return %c0_i32, %c0_i32_0 : i32, i32
  }
  func.func @transform_3(%arg0: i32) -> (i32, i32) {
    %c0_i32 = arith.constant 0 : i32
    %c0_i32_0 = arith.constant 0 : i32
    %c0_i32_1 = arith.constant 0 : i32
    return %c0_i32, %c0_i32_0 : i32, i32
  }
  func.func @transform_4(%arg0: i32) -> (i32, i32) {
    %c0_i32 = arith.constant 0 : i32
    %c0_i32_0 = arith.constant 0 : i32
    %c0_i32_1 = arith.constant 0 : i32
    return %c0_i32, %c0_i32_0 : i32, i32
  }
  func.func @transform_5(%arg0: i32) -> (i32, i32) {
    %c0_i32 = arith.constant 0 : i32
    %c0_i32_0 = arith.constant 0 : i32
    return %arg0, %c0_i32 : i32, i32
  }
}

</mosaic_0001>

<llo_original>
// kernel: policy_forward.1
$region0: #{policy_forward.1}
  #allocation0 [shape = 'u32[]', space=smem, size = 0x4, offset = 0x4, fixed_abs, tag = 'smem constant byte address 0x4 - core index']
  #allocation1 [shape = 'u32[72,128]{1,0:T(1,128)}', space=vmem, size = 0x9000, scoped, tag = 'internal scratch']
  %s0 = inlined_call_operand.vmem [shape: f32[48,4], index: 0, kind: input, shape index: {}]
  %s1 = inlined_call_operand.vmem [shape: f32[4,32], index: 1, kind: input, shape index: {}]
  %s2 = inlined_call_operand.vmem [shape: f32[1,32], index: 2, kind: input, shape index: {}]
  %s3 = inlined_call_operand.vmem [shape: f32[32,128], index: 3, kind: input, shape index: {}]
  %s4 = inlined_call_operand.vmem [shape: f32[1,128], index: 4, kind: input, shape index: {}]
  %s5 = inlined_call_operand.vmem [shape: f32[48,2], index: 5, kind: output, shape index: {}]
  %s6 = sld [smem:[#allocation0]]
  $region53: #{policy_forward.1} parent=0
    _
  %s8 = ssub.s32 1, %s6
  %s9 = scalar_select 0, %s8, %s6
  loop: start=0, step=1, limit=5
  $region2: #{policy_forward.1} parent=0 // loop_pre_header
    _
  $region3: #{policy_forward.1} parent=0 // loop_header
    %s11 = sphi 0, %s15
    %p12 = scmp.ge.s32.totalorder %s11, 5
    %s21 = sphi 0, %s23
    %s24 = sphi 0, %s21
    %s25 = sphi 0, %s24
    %s41 = sphi 0, %s25
    %s45 = sphi 0, %s45
    %s47 = sphi 0, %s45
    %s48 = sphi 0, %s47
    %s62 = sphi 0, %s48
    %s66 = sphi 0, %s66
    %s68 = sphi 0, %s66
    %s69 = sphi 0, %s68
    %s83 = sphi 0, %s69
    %s87 = sphi 0, %s87
    %s89 = sphi 0, %s87
    %s90 = sphi 0, %s89
    %s104 = sphi 0, %s90
    %s108 = sphi 0, %s108
    %s110 = sphi 0, %s108
    %s111 = sphi 0, %s110
    %s125 = sphi 0, %s111
    %s131 = sphi 0, %s133
    %s134 = sphi 0, %s131
    %s135 = sphi 0, %s134
    %s151 = sphi 0, %s135
  $region4: #{policy_forward.1} parent=0 // loop_header_branch
    %14 = sbr.rel (%p12) target = $region8
  $region5: #{policy_forward.1} parent=0 // loop_body
    %s16 = ssub.s32 %s11, 1
    %s17 = ssub.s32 %s11, 2
    %s18 = sadd.s32 %s11, 1
    %s19 = ssub.s32 %s11, %s18
    %p20 = scmp.eq.s32.totalorder %s19, 0
    %s22 = sadd.s32 %s21, 1
    %s23 = scalar_select %p20, %s21, %s22
    %p26 = pneg %p20
    %p27 = scmp.eq.s32.totalorder %s11, 2
    %p28 = por %p26, %p27
    %p29 = scmp.ne.s32.totalorder %s21, %s24
    %p30 = scmp.eq.s32.totalorder %s11, 0
    %p31 = por %p29, %p30
    %p32 = scmp.ne.s32.totalorder %s21, %s24
    %p33 = scmp.eq.s32.totalorder %s16, 2
    %p34 = por %p32, %p33
    %p35 = scmp.ne.s32.totalorder %s24, %s25
    %p36 = scmp.eq.s32.totalorder %s16, 0
    %p37 = por %p35, %p36
    %p38 = scmp.ne.s32.totalorder %s24, %s25
    %p39 = scmp.eq.s32.totalorder %s17, 2
    %p40 = por %p38, %p39
    %p42 = scmp.ne.s32.totalorder %s25, %s41
    %p43 = scmp.eq.s32.totalorder %s17, 0
    %p44 = por %p42, %p43
    %s46 = sadd.s32 %s45, 1
    %p49 = scmp.eq.s32.totalorder %s11, 2
    %p50 = scmp.ne.s32.totalorder %s45, %s47
    %p51 = scmp.eq.s32.totalorder %s11, 0
    %p52 = por %p50, %p51
    %p53 = scmp.ne.s32.totalorder %s45, %s47
    %p54 = scmp.eq.s32.totalorder %s16, 2
    %p55 = por %p53, %p54
    %p56 = scmp.ne.s32.totalorder %s47, %s48
    %p57 = scmp.eq.s32.totalorder %s16, 0
    %p58 = por %p56, %p57
    %p59 = scmp.ne.s32.totalorder %s47, %s48
    %p60 = scmp.eq.s32.totalorder %s17, 2
    %p61 = por %p59, %p60
    %p63 = scmp.ne.s32.totalorder %s48, %s62
    %p64 = scmp.eq.s32.totalorder %s17, 0
    %p65 = por %p63, %p64
    %s67 = sadd.s32 %s66, 1
    %p70 = scmp.eq.s32.totalorder %s11, 2
    %p71 = scmp.ne.s32.totalorder %s66, %s68
    %p72 = scmp.eq.s32.totalorder %s11, 0
    %p73 = por %p71, %p72
    %p74 = scmp.ne.s32.totalorder %s66, %s68
    %p75 = scmp.eq.s32.totalorder %s16, 2
    %p76 = por %p74, %p75
    %p77 = scmp.ne.s32.totalorder %s68, %s69
    %p78 = scmp.eq.s32.totalorder %s16, 0
    %p79 = por %p77, %p78
    %p80 = scmp.ne.s32.totalorder %s68, %s69
    %p81 = scmp.eq.s32.totalorder %s17, 2
    %p82 = por %p80, %p81
    %p84 = scmp.ne.s32.totalorder %s69, %s83
    %p85 = scmp.eq.s32.totalorder %s17, 0
    %p86 = por %p84, %p85
    %s88 = sadd.s32 %s87, 1
    %p91 = scmp.eq.s32.totalorder %s11, 2
    %p92 = scmp.ne.s32.totalorder %s87, %s89
    %p93 = scmp.eq.s32.totalorder %s11, 0
    %p94 = por %p92, %p93
    %p95 = scmp.ne.s32.totalorder %s87, %s89
    %p96 = scmp.eq.s32.totalorder %s16, 2
    %p97 = por %p95, %p96
    %p98 = scmp.ne.s32.totalorder %s89, %s90
    %p99 = scmp.eq.s32.totalorder %s16, 0
    %p100 = por %p98, %p99
    %p101 = scmp.ne.s32.totalorder %s89, %s90
    %p102 = scmp.eq.s32.totalorder %s17, 2
    %p103 = por %p101, %p102
    %p105 = scmp.ne.s32.totalorder %s90, %s104
    %p106 = scmp.eq.s32.totalorder %s17, 0
    %p107 = por %p105, %p106
    %s109 = sadd.s32 %s108, 1
    %p112 = scmp.eq.s32.totalorder %s11, 2
    %p113 = scmp.ne.s32.totalorder %s108, %s110
    %p114 = scmp.eq.s32.totalorder %s11, 0
    %p115 = por %p113, %p114
    %p116 = scmp.ne.s32.totalorder %s108, %s110
    %p117 = scmp.eq.s32.totalorder %s16, 2
    %p118 = por %p116, %p117
    %p119 = scmp.ne.s32.totalorder %s110, %s111
    %p120 = scmp.eq.s32.totalorder %s16, 0
    %p121 = por %p119, %p120
    %p122 = scmp.ne.s32.totalorder %s110, %s111
    %p123 = scmp.eq.s32.totalorder %s17, 2
    %p124 = por %p122, %p123
    %p126 = scmp.ne.s32.totalorder %s111, %s125
    %p127 = scmp.eq.s32.totalorder %s17, 0
    %p128 = por %p126, %p127
    %s129 = ssub.s32 %s11, %s18
    %p130 = scmp.eq.s32.totalorder %s129, 0
    %s132 = sadd.s32 %s131, 1
    %s133 = scalar_select %p130, %s131, %s132
    %p136 = pneg %p130
    %p137 = scmp.eq.s32.totalorder %s11, 2
    %p138 = por %p136, %p137
    %p139 = scmp.ne.s32.totalorder %s131, %s134
    %p140 = scmp.eq.s32.totalorder %s11, 0
    %p141 = por %p139, %p140
    %p142 = scmp.ne.s32.totalorder %s131, %s134
    %p143 = scmp.eq.s32.totalorder %s16, 2
    %p144 = por %p142, %p143
    %p145 = scmp.ne.s32.totalorder %s134, %s135
    %p146 = scmp.eq.s32.totalorder %s16, 0
    %p147 = por %p145, %p146
    %p148 = scmp.ne.s32.totalorder %s134, %s135
    %p149 = scmp.eq.s32.totalorder %s17, 2
    %p150 = por %p148, %p149
    %p152 = scmp.ne.s32.totalorder %s135, %s151
    %p153 = scmp.eq.s32.totalorder %s17, 0
    %p154 = por %p152, %p153
    %p155 = scmp.le.s32.totalorder 1, %s11
    %p156 = scmp.lt.s32.totalorder %s11, 4
    %p157 = pnand %p155, %p156
    %p158 = pneg %p157
    // Predicated region
    $region9: #{policy_forward.1} parent=5 // pred_check
      _
    $region10: #{policy_forward.1} parent=5 // pred_check_branch
      %160 = sbr.rel (%p157) target = $region12
    $region11: #{policy_forward.1} parent=5 // pred_region
      %s161 = ssub.s32 %s11, 1
      // Predicated region
      $region13: #{policy_forward.1} parent=11 // pred_check
        %p162 = pneg %p58
      $region14: #{policy_forward.1} parent=11 // pred_check_branch
        %164 = sbr.rel (%p162) target = $region16
      $region15: #{policy_forward.1} parent=11 // pred_region
        _
      $region16: #{policy_forward.1} parent=11 // pred_fallthru
        _
      // Predicated region
      $region17: #{policy_forward.1} parent=11 // pred_check
        %p165 = pneg %p79
      $region18: #{policy_forward.1} parent=11 // pred_check_branch
        %167 = sbr.rel (%p165) target = $region20
      $region19: #{policy_forward.1} parent=11 // pred_region
        _
      $region20: #{policy_forward.1} parent=11 // pred_fallthru
        _
      // Predicated region
      $region21: #{policy_forward.1} parent=11 // pred_check
        %p168 = pneg %p100
      $region22: #{policy_forward.1} parent=11 // pred_check_branch
        %170 = sbr.rel (%p168) target = $region24
      $region23: #{policy_forward.1} parent=11 // pred_region
        _
      $region24: #{policy_forward.1} parent=11 // pred_fallthru
        _
      // Predicated region
      $region25: #{policy_forward.1} parent=11 // pred_check
        %p171 = pneg %p121
      $region26: #{policy_forward.1} parent=11 // pred_check_branch
        %173 = sbr.rel (%p171) target = $region28
      $region27: #{policy_forward.1} parent=11 // pred_region
        _
      $region28: #{policy_forward.1} parent=11 // pred_fallthru
        _
    $region12: #{policy_forward.1} parent=5 // pred_fallthru
      _
    %p174 = scmp.lt.s32.totalorder %s11, 3
    // Predicated region
    $region29: #{policy_forward.1} parent=5 // pred_check
      %p175 = pneg %p174
    $region30: #{policy_forward.1} parent=5 // pred_check_branch
      %177 = sbr.rel (%p175) target = $region32
    $region31: #{policy_forward.1} parent=5 // pred_region
      // Predicated region
      $region33: #{policy_forward.1} parent=31 // pred_check
        %p178 = pneg %p31
      $region34: #{policy_forward.1} parent=31 // pred_check_branch
        %180 = sbr.rel (%p178) target = $region36
      $region35: #{policy_forward.1} parent=31 // pred_region
        %s181 = smul.u32 2, %s11
        %p182 = scmp.lt.s32.totalorder %s181, 5
        %s183 = scalar_select %p182, %s181, 5
        %s184 = smul.addr %s183, 8
        %s185 = scalar_lea.vmem %s0, %s184
        %s186 = smul.u32 2, %s11
      $region36: #{policy_forward.1} parent=31 // pred_fallthru
        _
    $region32: #{policy_forward.1} parent=5 // pred_fallthru
      _
    %p187 = scmp.le.s32.totalorder 1, %s11
    %p188 = scmp.lt.s32.totalorder %s11, 4
    %p189 = pnand %p187, %p188
    %p190 = pneg %p189
    // Predicated region
    $region37: #{policy_forward.1} parent=5 // pred_check
      _
    $region38: #{policy_forward.1} parent=5 // pred_check_branch
      %192 = sbr.rel (%p189) target = $region40
    $region39: #{policy_forward.1} parent=5 // pred_region
      %s193 = ssub.s32 %s11, 1
      %s194 = smul.u32 2, %s16
      %p195 = scmp.lt.s32.totalorder %s194, 5
      %s196 = scalar_select %p195, %s194, 5
      %s197 = smul.addr %s196, 8
      %s198 = scalar_lea.vmem %s0, %s197
      %p199 = pneg %p37
      %p200 = pneg %p34
      %p201 = pneg %p58
      %p202 = pneg %p55
      %p203 = pneg %p79
      %p204 = pneg %p76
      %p205 = pneg %p100
      %p206 = pneg %p97
      %p207 = pneg %p121
      %p208 = pneg %p118
      %p209 = pneg %p147
      %p210 = pneg %p144
      %s211 = smul.u32 2, %s16
      %p212 = scmp.lt.s32.totalorder %s211, 5
      %s213 = scalar_select %p212, %s211, 5
      %s214 = smul.addr %s213, 8
      %s215 = scalar_lea.vmem %s5, %s214
      %s216 = smul.u32 2, %s16
      %p217 = scmp.lt.s32.totalorder %s216, 5
      %s218 = scalar_select %p217, %s216, 5
      %s219 = smul.addr %s218, 8
      %s220 = scalar_lea.vmem %s0, %s219
      %s221 = smul.u32 2, %s16
      %s222 = smul.u32 2, %s16
      %p223 = scmp.lt.s32.totalorder %s222, 5
      %s224 = scalar_select %p223, %s222, 5
      %s225 = smul.addr %s224, 8
      %s226 = scalar_lea.vmem %s5, %s225
      %s227 = smul.u32 2, %s16
      %v228 = vld [vmem:[%s220] sm:$0xff]
      %v229 = vld [vmem:[%s220 + $0x8] sm:$0xff]
      %v230 = vld [vmem:[%s1] sm:$0xf]
      %v231 = vld [vmem:[%s2] sm:$0x1]
      %v233 = vperm.slane %v231, 0
      %vm235 = vcmask 31744
      %v237 = vsel %vm235, %v228, 0
      %v240 = vsel %vm235, %v229, 0
      %vm242 = vcmask 1043456
      %v244 = vsel %vm242, %v230, 0
      %246 = vmatpush.msra.mxu0 0.0
      %247 = vmatpush.msra.mxu0 0.0
      %248 = vmatpush.msra.mxu0 0.0
      %249 = vmatpush.msra.mxu0 0.0
      %250 = vmatpush.msra.mxu0 0.0
      %251 = vmatpush.msra.mxu0 0.0
      %252 = vmatpush.msra.mxu0 0.0
      %253 = vmatpush.msra.mxu0 0.0
      %254 = vmatpush.msra.mxu0 0.0
      %255 = vmatpush.msra.mxu0 0.0
      %256 = vmatpush.msra.mxu0 0.0
      %257 = vmatpush.msra.mxu0 0.0
      %258 = vmatpush.msra.mxu0 0.0
      %259 = vmatpush.msra.mxu0 0.0
      %260 = vmatpush.msra.mxu0 0.0
      %261 = vmatpush.msra.mxu0 %v244
      %262 = vmatmul.f32.gmra.mxu0 %v237
      %v263 = vpop.f32.mrf.mxu0
      %v264 = vadd.f32 %v233, %v263
      %265 = vmatmul.f32.gmra.mxu0 %v240
      %v266 = vpop.f32.mrf.mxu0
      %v267 = vadd.f32 %v233, %v266
      %268 = vdwg.mxu0
      %v269 = vmax.f32 %v264, 0.0
      %v270 = vmax.f32 %v267, 0.0
      %v271 = vld [vmem:[%s3] sm:$0xff]
      %v272 = vld [vmem:[%s3 + $0x8] sm:$0xff]
      %v273 = vld [vmem:[%s3 + $0x10] sm:$0xff]
      %v274 = vld [vmem:[%s3 + $0x18] sm:$0xff]
      %v275 = vld [vmem:[%s4] sm:$0x1]
      %v277 = vperm.slane %v275, 0
      %vm279 = vcmask 261120
      %v281 = vsel %vm279, %v269, 0
      %v284 = vsel %vm279, %v270, 0
      %286 = vmatpush.msra.mxu0 0.0
      %287 = vmatpush.msra.mxu0 0.0
      %288 = vmatpush.msra.mxu0 0.0
      %289 = vmatpush.msra.mxu0 0.0
      %290 = vmatpush.msra.mxu0 0.0
      %291 = vmatpush.msra.mxu0 0.0
      %292 = vmatpush.msra.mxu0 0.0
      %293 = vmatpush.msra.mxu0 0.0
      %294 = vmatpush.msra.mxu0 0.0
      %295 = vmatpush.msra.mxu0 0.0
      %296 = vmatpush.msra.mxu0 0.0
      %297 = vmatpush.msra.mxu0 0.0
      %298 = vmatpush.msra.mxu0 %v274
      %299 = vmatpush.msra.mxu0 %v273
      %300 = vmatpush.msra.mxu0 %v272
      %301 = vmatpush.msra.mxu0 %v271
      %302 = vmatmul.f32.gmra.mxu0 %v281
      %v303 = vpop.f32.mrf.mxu0
      %v304 = vadd.f32 %v277, %v303
      %305 = vmatmul.f32.gmra.mxu0 %v284
      %v306 = vpop.f32.mrf.mxu0
      %v307 = vadd.f32 %v277, %v306
      %308 = vdwg.mxu0
      %309 = vmax.xlane.f32.xlu0 %v304
      %v310 = vpop.xlane.xlu0 %309
      %311 = vmax.xlane.f32.xlu0 %v307
      %v312 = vpop.xlane.xlu0 %311
      %v313 = vsub.f32 %v304, %v310
      %v314 = vsub.f32 %v307, %v312
      %v315 = vmul.f32 %v313, 1.442695
      %v316 = vpow.pop %v315
      %v317 = vmul.f32 %v314, 1.442695
      %v318 = vpow.pop %v317
      %319 = vadd.xlane.f32.xlu0 %v316
      %v320 = vpop.xlane.xlu0 %319
      %321 = vadd.xlane.f32.xlu0 %v318
      %v322 = vpop.xlane.xlu0 %321
      %v323 = vrcp.pop %v320
      %v324 = vmul.f32 %v320, %v323
      %v325 = vsub.f32 1.0, %v324
      %v326 = vmul.f32 %v323, %v325
      %v327 = vadd.f32 %v323, %v326
      %vm328 = vweird.f32 %v320
      %vm329 = vweird.f32 %v323
      %vm330 = vmor %vm328, %vm329
      %v331 = vsel %vm330, %v323, %v327
      %v332 = vand.u32 2147483647, %v320
      %vm333 = vcmp.eq.f32.partialorder %v332, 8.507059e+37
      %v334 = vand.u32 %v320, 2147483648
      %v335 = vor.u32 1.1754944e-38, %v334
      %v336 = vsel %vm333, %v335, %v331
      %v337 = vrcp.pop %v322
      %v338 = vmul.f32 %v322, %v337
      %v339 = vsub.f32 1.0, %v338
      %v340 = vmul.f32 %v337, %v339
      %v341 = vadd.f32 %v337, %v340
      %vm342 = vweird.f32 %v322
      %vm343 = vweird.f32 %v337
      %vm344 = vmor %vm342, %vm343
      %v345 = vsel %vm344, %v337, %v341
      %v346 = vand.u32 2147483647, %v322
      %vm347 = vcmp.eq.f32.partialorder %v346, 8.507059e+37
      %v348 = vand.u32 %v322, 2147483648
      %v349 = vor.u32 1.1754944e-38, %v348
      %v350 = vsel %vm347, %v349, %v345
      %v351 = vmul.f32 %v316, %v336
      %v352 = vmul.f32 %v318, %v350
      %vm353 = vcmask 15360
      %354 = vst.msk [vmem:[%s226] sm:$0xff] %vm353, %v351
      %355 = vst.msk [vmem:[%s226 + $0x8] sm:$0xff] %vm353, %v352
      %s356 = smul.u32 2, %s16
      %p357 = scmp.lt.s32.totalorder %s356, 5
      %s358 = scalar_select %p357, %s356, 5
      %s359 = smul.addr %s358, 8
      %s360 = scalar_lea.vmem %s5, %s359
      // Predicated region
      $region41: #{policy_forward.1} parent=39 // pred_check
        %p361 = pneg %p144
      $region42: #{policy_forward.1} parent=39 // pred_check_branch
        %363 = sbr.rel (%p361) target = $region44
      $region43: #{policy_forward.1} parent=39 // pred_region
        %s364 = smul.u32 2, %s16
      $region44: #{policy_forward.1} parent=39 // pred_fallthru
        _
    $region40: #{policy_forward.1} parent=5 // pred_fallthru
      _
    %p365 = scmp.le.s32.totalorder 2, %s11
    // Predicated region
    $region45: #{policy_forward.1} parent=5 // pred_check
      %p366 = pneg %p365
    $region46: #{policy_forward.1} parent=5 // pred_check_branch
      %368 = sbr.rel (%p366) target = $region48
    $region47: #{policy_forward.1} parent=5 // pred_region
      %s369 = ssub.s32 %s11, 2
      // Predicated region
      $region49: #{policy_forward.1} parent=47 // pred_check
        %p370 = pneg %p150
      $region50: #{policy_forward.1} parent=47 // pred_check_branch
        %372 = sbr.rel (%p370) target = $region52
      $region51: #{policy_forward.1} parent=47 // pred_region
        %s373 = smul.u32 2, %s17
        %p374 = scmp.lt.s32.totalorder %s373, 5
        %s375 = scalar_select %p374, %s373, 5
        %s376 = smul.addr %s375, 8
        %s377 = scalar_lea.vmem %s5, %s376
      $region52: #{policy_forward.1} parent=47 // pred_fallthru
        _
    $region48: #{policy_forward.1} parent=5 // pred_fallthru
      _
  $region6: #{policy_forward.1} parent=0 // loop_footer
    %s15 = sadd.s32 1, %s11
  $region7: #{policy_forward.1} parent=0 // loop_footer_branch
    %10 = sbr.rel target = $region3
  $region8: #{policy_forward.1} parent=0 // loop_exit
    _

</llo_original>
